<compile_context>
chip_gen: v7x
topology: tpu7x:2x2x1
jax: 0.10.0
libtpu: 0.0.40
codegen_flags: <defaults>
</compile_context>

<pallas_src>
import functools
import math

import jax
import jax.numpy as jnp
import numpy as np
from jax.experimental import pallas as pl
from jax.experimental.pallas import tpu as pltpu


def _round_up(x, m):
    return (x + m - 1) // m * m


# ----------------------------- Pallas kernels ------------------------------ #

def expand_m_kernel(wy_ref, wx_ref, m_ref):
    """M[py, px, q] = Wy[py, q] * Wx[px, q] for a tile of py rows (bf16 out).

    wy_ref: (gp, 1, ncols) f32, wx_ref: (1, n, ncols) f32 -> m_ref (gp, n, ncols).
    Pure broadcast-multiply: all index math lives in tiny plain-JAX tables.
    """
    m_ref[...] = (wy_ref[...] * wx_ref[...]).astype(m_ref.dtype)


def remap_matmul_kernel(img_ref, m_ref, o_ref):
    """One MXU matmul per (tm, tn) output tile: out = img @ M.

    The f32 image tile is cast to bf16 in-kernel (free on the VPU, no extra
    HBM pass); accumulation is f32 via preferred_element_type.
    """
    o_ref[...] = jnp.dot(img_ref[...].astype(m_ref.dtype), m_ref[...],
                         preferred_element_type=jnp.float32).astype(o_ref.dtype)


# ------------------------------ wrappers ------------------------------------ #

_VMEM_CAP = 48 * 1024 * 1024       # conservative: v7x has 64 MiB per TC


def build_m_pallas(wy, wx, n, ncols, compute_dtype=jnp.bfloat16):
    """Expand the separable weight tables into M [n*n, ncols] (bf16), tiled over py."""
    wy3 = wy.reshape(n, 1, ncols)
    wx3 = wx.reshape(1, n, ncols)

    # py-row groups sized so each output block is ~2 MiB of bf16.
    row_bytes = n * ncols * 2
    gp = max(1, min(n, (2 * 1024 * 1024) // max(1, row_bytes)))

    vmem = (2 * gp * n * ncols * 2          # output blocks (double-buffered)
            + 2 * gp * ncols * 4            # wy blocks
            + 2 * n * ncols * 4             # wx (resident, but budget 2x)
            + (4 << 20))

    m3 = pl.pallas_call(
        expand_m_kernel,
        out_shape=jax.ShapeDtypeStruct((n, n, ncols), compute_dtype),
        grid=(pl.cdiv(n, gp),),
        in_specs=[
            pl.BlockSpec((gp, 1, ncols), lambda i: (i, 0, 0)),
            pl.BlockSpec((1, n, ncols), lambda i: (0, 0, 0)),
        ],
        out_specs=pl.BlockSpec((gp, n, ncols), lambda i: (i, 0, 0)),
        compiler_params=pltpu.CompilerParams(
            dimension_semantics=("parallel",),
            vmem_limit_bytes=min(int(vmem), _VMEM_CAP)),
    )(wy3, wx3)
    return m3.reshape(n * n, ncols)


def remap_pallas(img_flat, dx_flat, dy_flat, n, compute_dtype=jnp.bfloat16):
    """Bilinear remap of img_flat [BC, n*n] by displacement fields dx, dy [n*n]."""
    BC, n2 = img_flat.shape
    # Lane-dense output columns; when n*n is already 128-aligned (n=16/32/64/224)
    # there is no padding and no final slice.  Otherwise pad to 256 (MXU width
    # on v6e/v7x) and slice at the end.
    ncols = n2 if n2 % 128 == 0 else _round_up(n2, 256)
    fmax = float(n - 1)

    # ---- tiny per-output-pixel quantities (plain JAX; all (n2,) / (n, n2)) ----
    q = jnp.arange(n2, dtype=jnp.int32)
    xg = (q % n).astype(jnp.float32)
    yg = (q // n).astype(jnp.float32)
    src = jnp.arange(n, dtype=jnp.float32)[:, None]            # source coord (n, 1)

    def axis_weights(grid_1d, disp):
        pos = jnp.clip(grid_1d - disp, 0.0, fmax)              # sampling position
        lo = jnp.floor(pos)
        hi = jnp.ceil(pos)
        frac = pos - lo
        return ((1.0 - frac)[None, :] * (src == lo[None, :]).astype(jnp.float32)
                + frac[None, :] * (src == hi[None, :]).astype(jnp.float32))

    wy = axis_weights(yg, dy_flat)                             # (n, n2)
    wx = axis_weights(xg, dx_flat)                             # (n, n2)
    if ncols != n2:
        # Padded output columns get weight 0 (sliced off below anyway).
        wy = jnp.pad(wy, ((0, 0), (0, ncols - n2)))
        wx = jnp.pad(wx, ((0, 0), (0, ncols - n2)))

    # ---- build M once per call (bf16, row-tiled) ----
    m = build_m_pallas(wy, wx, n, ncols, compute_dtype)        # (n2, ncols)

    # ---- adaptive tiles ----
    itm = img_flat.dtype.itemsize
    tn = min(ncols, 1024)
    # LHS row tile sized for ~6 MiB per buffer, capped at 1024 rows: big row
    # tiles amortize the per-grid-step overhead at small n.
    tm = max(16, min(1024, (6 * 1024 * 1024) // max(1, n2 * itm)))
    tm = (tm // 16) * 16
    if BC <= tm:
        tm = BC            # single full-height row tile (full-dim block, any BC)

    tile_bytes = (2 * tm * n2 * itm        # image tiles (double-buffered)
                  + 2 * n2 * tn * 2        # M column tiles (bf16)
                  + 2 * tm * tn * itm)     # output tiles
    vmem_limit = min(int(tile_bytes) + (6 << 20), _VMEM_CAP)

    out = pl.pallas_call(
        remap_matmul_kernel,
        out_shape=jax.ShapeDtypeStruct((BC, ncols), img_flat.dtype),
        grid=(pl.cdiv(BC, tm), pl.cdiv(ncols, tn)),
        in_specs=[
            pl.BlockSpec((tm, n2), lambda i, j: (i, 0)),       # constant over j
            pl.BlockSpec((n2, tn), lambda i, j: (0, j)),       # streamed columns
        ],
        out_specs=pl.BlockSpec((tm, tn), lambda i, j: (i, j)),
        compiler_params=pltpu.CompilerParams(
            dimension_semantics=("parallel", "parallel"),
            vmem_limit_bytes=vmem_limit),
    )(img_flat, m)

    if ncols != n2:
        out = out[:, :n2]
    return out


# ------------------------- diffeomorphism helpers -------------------------- #

def temperature_range(n, cut):
    cut = cut + 1e-6
    log = jnp.log(cut)
    T1 = 1.0 / (math.pi * n ** 2 * log)
    T2 = 4.0 / (math.pi ** 3 * cut ** 2 * log)
    return T1, T2


def scalar_field(key, n, cut, cutmax):
    """Low-frequency random scalar field with (traced) cutoff `cut`.

    Built with the static maximum number of modes `cutmax`; the cutoff only
    enters through the radial envelope mask r < cut + 0.5 (modes beyond cut
    are automatically zeroed), so `cut` never needs a host round-trip.
    """
    x = jnp.linspace(0.0, 1.0, n, dtype=jnp.float32)
    k = jnp.arange(1, cutmax + 1, dtype=jnp.float32)
    i, j = jnp.meshgrid(k, k, indexing="ij")
    r = jnp.sqrt(i * i + j * j)
    e = jnp.where(r < cut + 0.5, 1.0 / r, 0.0)
    c = jax.random.normal(key, (cutmax, cutmax), dtype=jnp.float32) * e
    s = jnp.sin(jnp.pi * x[:, None] * k[None, :])
    return jnp.einsum("ij,xi,yj->yx", c, s, s)


# ------------------------------ DiffeoAug ---------------------------------- #

def diffeo_aug_forward(imgs, key, *, logsT, logrT, logscut, logrcut,
                       cutmin, cutmax):
    """JAX/Pallas equivalent of DiffeoAug.forward. imgs: NCHW [B, C, n, n]."""
    B, C, H, W = imgs.shape
    assert H == W, "Image(s) should be square."
    n = W

    k_cut, k_T, k_u, k_v = jax.random.split(key, 4)

    sT = 10.0 ** logsT
    rT = 10.0 ** logrT
    scut = 10.0 ** logscut
    rcut = 10.0 ** logrcut

    # Frequency cutoff: Beta sample, scaled and truncated toward zero (matches
    # torch .int()); kept on-device -> no host sync, one async jit dispatch.
    cut_sample = jax.random.beta(
        k_cut, scut - scut / (rcut + 1.0), scut / (rcut + 1.0))
    cut = jnp.floor(cut_sample * (cutmax + 1 - cutmin) + cutmin).astype(jnp.float32)

    T1, T2 = temperature_range(n, cut)
    T = jax.random.beta(k_T, sT - sT / (rT + 1.0), sT / (rT + 1.0)) * (T2 - T1) + T1

    # Low-frequency random scalar fields u, v (tiny einsum -> plain JAX glue).
    u = scalar_field(k_u, n, cut, cutmax)
    v = scalar_field(k_v, n, cut, cutmax)
    dx = jnp.sqrt(T) * u * n
    dy = jnp.sqrt(T) * v * n

    img_flat = imgs.reshape(B * C, n * n)
    out_flat = remap_pallas(img_flat,
                            dx.reshape(-1).astype(jnp.float32),
                            dy.reshape(-1).astype(jnp.float32), n)
    return out_flat.reshape(B, C, n, n).astype(imgs.dtype), dx, dy


# Pure-JAX reference of torch `remap` for a correctness spot-check.
def remap_reference(imgs, dx, dy):
    B, C, n, m = imgs.shape
    y, x = jnp.meshgrid(jnp.arange(n, dtype=dx.dtype),
                        jnp.arange(m, dtype=dx.dtype), indexing="ij")
    xn = jnp.clip(x - dx, 0, m - 1)
    yn = jnp.clip(y - dy, 0, n - 1)
    xf = jnp.floor(xn).astype(jnp.int32)
    yf = jnp.floor(yn).astype(jnp.int32)
    xc = jnp.ceil(xn).astype(jnp.int32)
    yc = jnp.ceil(yn).astype(jnp.int32)
    xv = xn - xf
    yv = yn - yf
    g = lambda yy, xx: imgs[..., yy, xx]
    return ((1 - yv) * (1 - xv) * g(yf, xf) + (1 - yv) * xv * g(yf, xc)
            + yv * (1 - xv) * g(yc, xf) + yv * xv * g(yc, xc))


if __name__ == "__main__":
    # Deterministic "parameters" (module __init__ args).
    params = dict(logsT=0.5, logrT=1.0, logscut=0.5, logrcut=1.0,
                  cutmin=2, cutmax=8)

    key = jax.random.PRNGKey(0)
    k_img, k_aug = jax.random.split(key)

    B, C, n = 2, 4, 16
    imgs = jax.random.normal(k_img, (B, C, n, n), dtype=jnp.float32)

    fwd = jax.jit(functools.partial(diffeo_aug_forward, **params))
    out, dx, dy = fwd(imgs, k_aug)
    out = jax.block_until_ready(out)

    # Spot-check the Pallas remap against a pure-JAX gather reference.
    # Tolerance loosened vs. f32 because M and the image tiles run through the
    # MXU in bfloat16 (f32 accumulation) -- fine for data augmentation.
    ref = jax.block_until_ready(remap_reference(imgs, dx, dy))
    np.testing.assert_allclose(np.asarray(out), np.asarray(ref),
                               rtol=3e-2, atol=3e-2)

    assert out.shape == imgs.shape and out.dtype == imgs.dtype
    print("KERNEL_OK")
</pallas_src>

<mosaic_0001>
module attributes {stable_mosaic.version = 11 : i64} {
  func.func @expand_m_kernel(%arg0: i32, %arg1: memref<16x1x256xf32, #tpu.memory_space<vmem>>, %arg2: memref<1x16x256xf32, #tpu.memory_space<vmem>>, %arg3: memref<16x16x256xbf16, #tpu.memory_space<vmem>>) attributes {dimension_semantics = [#tpu.dimension_semantics<parallel>], iteration_bounds = array<i64: 1>, scalar_prefetch = 0 : i64, scratch_operands = 0 : i64, tpu.core_type = #tpu.core_type<tc>, window_params = [{transform_indices = @transform_0, window_bounds = array<i64: 16, 1, 256>}, {pipeline_mode = #tpu.pipeline_mode<synchronous>, transform_indices = @transform_1, window_bounds = array<i64: 1, 16, 256>}, {transform_indices = @transform_2, window_bounds = array<i64: 16, 16, 256>}]} {
    %c0 = arith.constant 0 : index
    %c0_0 = arith.constant 0 : index
    %c0_1 = arith.constant 0 : index
    %0 = vector.load %arg1[%c0, %c0_0, %c0_1] : memref<16x1x256xf32, #tpu.memory_space<vmem>>, vector<16x1x256xf32>
    %c0_2 = arith.constant 0 : index
    %c0_3 = arith.constant 0 : index
    %c0_4 = arith.constant 0 : index
    %1 = vector.load %arg2[%c0_2, %c0_3, %c0_4] : memref<1x16x256xf32, #tpu.memory_space<vmem>>, vector<1x16x256xf32>
    %2 = vector.broadcast %0 : vector<16x1x256xf32> to vector<16x16x256xf32>
    %3 = vector.broadcast %1 : vector<1x16x256xf32> to vector<16x16x256xf32>
    %4 = arith.mulf %2, %3 : vector<16x16x256xf32>
    %5 = arith.truncf %4 : vector<16x16x256xf32> to vector<16x16x256xbf16>
    %c0_5 = arith.constant 0 : index
    %c0_6 = arith.constant 0 : index
    %c0_7 = arith.constant 0 : index
    %6 = vector.load %arg3[%c0_5, %c0_6, %c0_7] : memref<16x16x256xbf16, #tpu.memory_space<vmem>>, vector<16x16x256xbf16>
    tpu.vector_store %arg3[%c0_5, %c0_6, %c0_7], %5 {strides = array<i32>} : memref<16x16x256xbf16, #tpu.memory_space<vmem>>, vector<16x16x256xbf16>,
    return
  }
  func.func @transform_0(%arg0: i32) -> (i32, i32, i32) {
    %c0_i32 = arith.constant 0 : i32
    %c0_i32_0 = arith.constant 0 : i32
    %c0_i32_1 = arith.constant 0 : i32
    return %arg0, %c0_i32, %c0_i32_0 : i32, i32, i32
  }
  func.func @transform_1(%arg0: i32) -> (i32, i32, i32) {
    %c0_i32 = arith.constant 0 : i32
    %c0_i32_0 = arith.constant 0 : i32
    %c0_i32_1 = arith.constant 0 : i32
    %c0_i32_2 = arith.constant 0 : i32
    return %c0_i32, %c0_i32_0, %c0_i32_1 : i32, i32, i32
  }
  func.func @transform_2(%arg0: i32) -> (i32, i32, i32) {
    %c0_i32 = arith.constant 0 : i32
    %c0_i32_0 = arith.constant 0 : i32
    %c0_i32_1 = arith.constant 0 : i32
    return %arg0, %c0_i32, %c0_i32_0 : i32, i32, i32
  }
}

module attributes {stable_mosaic.version = 11 : i64} {
  func.func @remap_matmul_kernel(%arg0: i32, %arg1: i32, %arg2: memref<8x256xf32, #tpu.memory_space<vmem>>, %arg3: memref<256x256xbf16, #tpu.memory_space<vmem>>, %arg4: memref<8x256xf32, #tpu.memory_space<vmem>>) attributes {dimension_semantics = [#tpu.dimension_semantics<parallel>, #tpu.dimension_semantics<parallel>], iteration_bounds = array<i64: 1, 1>, scalar_prefetch = 0 : i64, scratch_operands = 0 : i64, tpu.core_type = #tpu.core_type<tc>, window_params = [{transform_indices = @transform_0, window_bounds = array<i64: 8, 256>}, {transform_indices = @transform_1, window_bounds = array<i64: 256, 256>}, {transform_indices = @transform_2, window_bounds = array<i64: 8, 256>}]} {
    %c0 = arith.constant 0 : index
    %c0_0 = arith.constant 0 : index
    %0 = vector.load %arg2[%c0, %c0_0] : memref<8x256xf32, #tpu.memory_space<vmem>>, vector<8x256xf32>
    %1 = arith.truncf %0 : vector<8x256xf32> to vector<8x256xbf16>
    %c0_1 = arith.constant 0 : index
    %c0_2 = arith.constant 0 : index
    %2 = vector.load %arg3[%c0_1, %c0_2] : memref<256x256xbf16, #tpu.memory_space<vmem>>, vector<256x256xbf16>
    %cst = arith.constant dense<0.000000e+00> : vector<8x256xf32>
    %3 = tpu.matmul %1, %2, %cst {dimension_numbers = #tpu.dot_dimension_numbers<[1], [0], [0], [1], [0, 0, 1, 1], [], []>} : vector<8x256xbf16>, vector<256x256xbf16>, vector<8x256xf32> -> vector<8x256xf32>
    %c0_3 = arith.constant 0 : index
    %c0_4 = arith.constant 0 : index
    %4 = vector.load %arg4[%c0_3, %c0_4] : memref<8x256xf32, #tpu.memory_space<vmem>>, vector<8x256xf32>
    tpu.vector_store %arg4[%c0_3, %c0_4], %3 {strides = array<i32>} : memref<8x256xf32, #tpu.memory_space<vmem>>, vector<8x256xf32>,
    return
  }
  func.func @transform_0(%arg0: i32, %arg1: i32) -> (i32, i32) {
    %c0_i32 = arith.constant 0 : i32
    %c0_i32_0 = arith.constant 0 : i32
    return %arg0, %c0_i32 : i32, i32
  }
  func.func @transform_1(%arg0: i32, %arg1: i32) -> (i32, i32) {
    %c0_i32 = arith.constant 0 : i32
    %c0_i32_0 = arith.constant 0 : i32
    return %c0_i32, %arg1 : i32, i32
  }
  func.func @transform_2(%arg0: i32, %arg1: i32) -> (i32, i32) {
    %c0_i32 = arith.constant 0 : i32
    return %arg0, %arg1 : i32, i32
  }
}

</mosaic_0001>

<llo_original>
// kernel: diffeo_aug_forward.5
$region0: #{diffeo_aug_forward.5}
  #allocation0 [shape = 'u32[]', space=smem, size = 0x4, offset = 0x4, fixed_abs, tag = 'smem constant byte address 0x4 - core index']
  #allocation1 [shape = 'u32[144,128]{1,0:T(1,128)}', space=vmem, size = 0x12000, scoped, tag = 'internal scratch']
  %s0 = inlined_call_operand.vmem [shape: f32[8,256], index: 0, kind: input, shape index: {}]
  %s1 = inlined_call_operand.vmem [shape: bf16[256,256], index: 1, kind: input, shape index: {}]
  %s2 = inlined_call_operand.vmem [shape: f32[8,256], index: 2, kind: output, shape index: {}]
  %s3 = sld [smem:[#allocation0]]
  $region18: #{diffeo_aug_forward.5} parent=0
    _
  %s5 = ssub.s32 1, %s3
  %s6 = scalar_select 0, %s5, %s3
  // Predicated region
  $region2: #{diffeo_aug_forward.5} parent=0 // pred_check
    _
  $region3: #{diffeo_aug_forward.5} parent=0 // pred_check_branch
    %8 = sbr.rel (0) target = $region5
  $region4: #{diffeo_aug_forward.5} parent=0 // pred_region
    _
  $region5: #{diffeo_aug_forward.5} parent=0 // pred_fallthru
    _
  // Predicated region
  $region6: #{diffeo_aug_forward.5} parent=0 // pred_check
    _
  $region7: #{diffeo_aug_forward.5} parent=0 // pred_check_branch
    %10 = sbr.rel (0) target = $region9
  $region8: #{diffeo_aug_forward.5} parent=0 // pred_region
    _
  $region9: #{diffeo_aug_forward.5} parent=0 // pred_fallthru
    _
  %v11 = vld [vmem:[%s0] sm:$0xff]
  %v12 = vld [vmem:[%s0 + $0x8] sm:$0xff]
  %v13 = vpack.c.bf16 %v11, %v11
  %v14 = vpack.c.bf16 %v12, %v12
  %v15 = vld [vmem:[%s1] sm:$0xff]
  %v16 = vld [vmem:[%s1 + $0x8] sm:$0xff]
  %v17 = vld [vmem:[%s1 + $0x10] sm:$0xff]
  %v18 = vld [vmem:[%s1 + $0x18] sm:$0xff]
  %v19 = vld [vmem:[%s1 + $0x20] sm:$0xff]
  %v20 = vld [vmem:[%s1 + $0x28] sm:$0xff]
  %v21 = vld [vmem:[%s1 + $0x30] sm:$0xff]
  %v22 = vld [vmem:[%s1 + $0x38] sm:$0xff]
  %v23 = vld [vmem:[%s1 + $0x40] sm:$0xff]
  %v24 = vld [vmem:[%s1 + $0x48] sm:$0xff]
  %v25 = vld [vmem:[%s1 + $0x50] sm:$0xff]
  %v26 = vld [vmem:[%s1 + $0x58] sm:$0xff]
  %v27 = vld [vmem:[%s1 + $0x60] sm:$0xff]
  %v28 = vld [vmem:[%s1 + $0x68] sm:$0xff]
  %v29 = vld [vmem:[%s1 + $0x70] sm:$0xff]
  %v30 = vld [vmem:[%s1 + $0x78] sm:$0xff]
  %v31 = vld [vmem:[%s1 + $0x80] sm:$0xff]
  %v32 = vld [vmem:[%s1 + $0x88] sm:$0xff]
  %v33 = vld [vmem:[%s1 + $0x90] sm:$0xff]
  %v34 = vld [vmem:[%s1 + $0x98] sm:$0xff]
  %v35 = vld [vmem:[%s1 + $0xa0] sm:$0xff]
  %v36 = vld [vmem:[%s1 + $0xa8] sm:$0xff]
  %v37 = vld [vmem:[%s1 + $0xb0] sm:$0xff]
  %v38 = vld [vmem:[%s1 + $0xb8] sm:$0xff]
  %v39 = vld [vmem:[%s1 + $0xc0] sm:$0xff]
  %v40 = vld [vmem:[%s1 + $0xc8] sm:$0xff]
  %v41 = vld [vmem:[%s1 + $0xd0] sm:$0xff]
  %v42 = vld [vmem:[%s1 + $0xd8] sm:$0xff]
  %v43 = vld [vmem:[%s1 + $0xe0] sm:$0xff]
  %v44 = vld [vmem:[%s1 + $0xe8] sm:$0xff]
  %v45 = vld [vmem:[%s1 + $0xf0] sm:$0xff]
  %v46 = vld [vmem:[%s1 + $0xf8] sm:$0xff]
  %v79 = vunpack.c.l.b16 %v15
  %v80 = vunpack.c.h.b16 %v15
  %v81 = vunpack.c.l.b16 %v16
  %v82 = vunpack.c.h.b16 %v16
  %v83 = vunpack.c.l.b16 %v17
  %v84 = vunpack.c.h.b16 %v17
  %v85 = vunpack.c.l.b16 %v18
  %v86 = vunpack.c.h.b16 %v18
  %v87 = vunpack.c.l.b16 %v19
  %v88 = vunpack.c.h.b16 %v19
  %v89 = vunpack.c.l.b16 %v20
  %v90 = vunpack.c.h.b16 %v20
  %v91 = vunpack.c.l.b16 %v21
  %v92 = vunpack.c.h.b16 %v21
  %v93 = vunpack.c.l.b16 %v22
  %v94 = vunpack.c.h.b16 %v22
  %v95 = vunpack.c.l.b16 %v23
  %v96 = vunpack.c.h.b16 %v23
  %v97 = vunpack.c.l.b16 %v24
  %v98 = vunpack.c.h.b16 %v24
  %v99 = vunpack.c.l.b16 %v25
  %v100 = vunpack.c.h.b16 %v25
  %v101 = vunpack.c.l.b16 %v26
  %v102 = vunpack.c.h.b16 %v26
  %v103 = vunpack.c.l.b16 %v27
  %v104 = vunpack.c.h.b16 %v27
  %v105 = vunpack.c.l.b16 %v28
  %v106 = vunpack.c.h.b16 %v28
  %v107 = vunpack.c.l.b16 %v29
  %v108 = vunpack.c.h.b16 %v29
  %v109 = vunpack.c.l.b16 %v30
  %v110 = vunpack.c.h.b16 %v30
  %v111 = vunpack.c.l.b16 %v31
  %v112 = vunpack.c.h.b16 %v31
  %v113 = vunpack.c.l.b16 %v32
  %v114 = vunpack.c.h.b16 %v32
  %v115 = vunpack.c.l.b16 %v33
  %v116 = vunpack.c.h.b16 %v33
  %v117 = vunpack.c.l.b16 %v34
  %v118 = vunpack.c.h.b16 %v34
  %v119 = vunpack.c.l.b16 %v35
  %v120 = vunpack.c.h.b16 %v35
  %v121 = vunpack.c.l.b16 %v36
  %v122 = vunpack.c.h.b16 %v36
  %v123 = vunpack.c.l.b16 %v37
  %v124 = vunpack.c.h.b16 %v37
  %v125 = vunpack.c.l.b16 %v38
  %v126 = vunpack.c.h.b16 %v38
  %v127 = vunpack.c.l.b16 %v39
  %v128 = vunpack.c.h.b16 %v39
  %v129 = vunpack.c.l.b16 %v40
  %v130 = vunpack.c.h.b16 %v40
  %v131 = vunpack.c.l.b16 %v41
  %v132 = vunpack.c.h.b16 %v41
  %v133 = vunpack.c.l.b16 %v42
  %v134 = vunpack.c.h.b16 %v42
  %v135 = vunpack.c.l.b16 %v43
  %v136 = vunpack.c.h.b16 %v43
  %v137 = vunpack.c.l.b16 %v44
  %v138 = vunpack.c.h.b16 %v44
  %v139 = vunpack.c.l.b16 %v45
  %v140 = vunpack.c.h.b16 %v45
  %v141 = vunpack.c.l.b16 %v46
  %v142 = vunpack.c.h.b16 %v46
  %v143 = vpack.c.b16 %v81, %v79
  %v144 = vpack.c.b16 %v82, %v80
  %v145 = vpack.c.b16 %v85, %v83
  %v146 = vpack.c.b16 %v86, %v84
  %v147 = vpack.c.b16 %v89, %v87
  %v148 = vpack.c.b16 %v90, %v88
  %v149 = vpack.c.b16 %v93, %v91
  %v150 = vpack.c.b16 %v94, %v92
  %v151 = vpack.c.b16 %v97, %v95
  %v152 = vpack.c.b16 %v98, %v96
  %v153 = vpack.c.b16 %v101, %v99
  %v154 = vpack.c.b16 %v102, %v100
  %v155 = vpack.c.b16 %v105, %v103
  %v156 = vpack.c.b16 %v106, %v104
  %v157 = vpack.c.b16 %v109, %v107
  %v158 = vpack.c.b16 %v110, %v108
  %v159 = vpack.c.b16 %v113, %v111
  %v160 = vpack.c.b16 %v114, %v112
  %v161 = vpack.c.b16 %v117, %v115
  %v162 = vpack.c.b16 %v118, %v116
  %v163 = vpack.c.b16 %v121, %v119
  %v164 = vpack.c.b16 %v122, %v120
  %v165 = vpack.c.b16 %v125, %v123
  %v166 = vpack.c.b16 %v126, %v124
  %v167 = vpack.c.b16 %v129, %v127
  %v168 = vpack.c.b16 %v130, %v128
  %v169 = vpack.c.b16 %v133, %v131
  %v170 = vpack.c.b16 %v134, %v132
  %v171 = vpack.c.b16 %v137, %v135
  %v172 = vpack.c.b16 %v138, %v136
  %v173 = vpack.c.b16 %v141, %v139
  %v174 = vpack.c.b16 %v142, %v140
  %207 = vmatprep.subr.bf16.mxu0 %v144
  %208 = vmatpush1.bf16.msra.mxu0 %v143
  %209 = vmatprep.subr.bf16.mxu0 %v146
  %210 = vmatpush1.bf16.msra.mxu0 %v145
  %211 = vmatprep.subr.bf16.mxu0 %v148
  %212 = vmatpush1.bf16.msra.mxu0 %v147
  %213 = vmatprep.subr.bf16.mxu0 %v150
  %214 = vmatpush1.bf16.msra.mxu0 %v149
  %215 = vmatprep.subr.bf16.mxu0 %v152
  %216 = vmatpush1.bf16.msra.mxu0 %v151
  %217 = vmatprep.subr.bf16.mxu0 %v154
  %218 = vmatpush1.bf16.msra.mxu0 %v153
  %219 = vmatprep.subr.bf16.mxu0 %v156
  %220 = vmatpush1.bf16.msra.mxu0 %v155
  %221 = vmatprep.subr.bf16.mxu0 %v158
  %222 = vmatpush1.bf16.msra.mxu0 %v157
  %223 = vmatprep.subr.bf16.mxu0 %v160
  %224 = vmatpush1.bf16.msra.mxu0 %v159
  %225 = vmatprep.subr.bf16.mxu0 %v162
  %226 = vmatpush1.bf16.msra.mxu0 %v161
  %227 = vmatprep.subr.bf16.mxu0 %v164
  %228 = vmatpush1.bf16.msra.mxu0 %v163
  %229 = vmatprep.subr.bf16.mxu0 %v166
  %230 = vmatpush1.bf16.msra.mxu0 %v165
  %231 = vmatprep.subr.bf16.mxu0 %v168
  %232 = vmatpush1.bf16.msra.mxu0 %v167
  %233 = vmatprep.subr.bf16.mxu0 %v170
  %234 = vmatpush1.bf16.msra.mxu0 %v169
  %235 = vmatprep.subr.bf16.mxu0 %v172
  %236 = vmatpush1.bf16.msra.mxu0 %v171
  %237 = vmatprep.subr.bf16.mxu0 %v174
  %238 = vmatpush1.bf16.msra.mxu0 %v173
  %239 = vmatprep.mubr.bf16.mxu0 %v14
  %240 = vmatmul.mubr.bf16.gmra.mrb[0].mxu0 %v13
  %v241 = vpop.f32.mrb[0].mxu0
  %v242 = vadd.f32 0.0, %v241
  %v243 = vpop.f32.mrb[0].mxu0
  %v244 = vadd.f32 0.0, %v243
  %v245 = vpop.f32.mrb[0].mxu0
  %v246 = vpop.f32.mrb[0].mxu0
  %247 = vdwg.mxu0
  %248 = vst [vmem:[%s2] sm:$0xff] %v242
  %249 = vst [vmem:[%s2 + $0x8] sm:$0xff] %v244
  // Predicated region
  $region10: #{diffeo_aug_forward.5} parent=0 // pred_check
    _
  $region11: #{diffeo_aug_forward.5} parent=0 // pred_check_branch
    %251 = sbr.rel (0) target = $region13
  $region12: #{diffeo_aug_forward.5} parent=0 // pred_region
    _
  $region13: #{diffeo_aug_forward.5} parent=0 // pred_fallthru
    _
  // Predicated region
  $region14: #{diffeo_aug_forward.5} parent=0 // pred_check
    _
  $region15: #{diffeo_aug_forward.5} parent=0 // pred_check_branch
    %253 = sbr.rel (0) target = $region17
  $region16: #{diffeo_aug_forward.5} parent=0 // pred_region
    _
  $region17: #{diffeo_aug_forward.5} parent=0 // pred_fallthru
    _

// kernel: diffeo_aug_forward.4
$region0: #{diffeo_aug_forward.4}
  #allocation0 [shape = 'u32[]', space=smem, size = 0x4, offset = 0x4, fixed_abs, tag = 'smem constant byte address 0x4 - core index']
  #allocation1 [shape = 'u32[144,128]{1,0:T(1,128)}', space=vmem, size = 0x12000, scoped, tag = 'internal scratch']
  %s0 = inlined_call_operand.vmem [shape: f32[16,1,256], index: 0, kind: input, shape index: {}]
  %s1 = inlined_call_operand.vmem [shape: f32[1,16,256], index: 1, kind: input, shape index: {}]
  %s2 = inlined_call_operand.vmem [shape: bf16[16,16,256], index: 2, kind: output, shape index: {}]
  %s3 = sld [smem:[#allocation0]]
  $region18: #{diffeo_aug_forward.4} parent=0
    _
  %s5 = ssub.s32 1, %s3
  %s6 = scalar_select 0, %s5, %s3
  // Predicated region
  $region2: #{diffeo_aug_forward.4} parent=0 // pred_check
    _
  $region3: #{diffeo_aug_forward.4} parent=0 // pred_check_branch
    %8 = sbr.rel (0) target = $region5
  $region4: #{diffeo_aug_forward.4} parent=0 // pred_region
    _
  $region5: #{diffeo_aug_forward.4} parent=0 // pred_fallthru
    _
  // Predicated region
  $region6: #{diffeo_aug_forward.4} parent=0 // pred_check
    _
  $region7: #{diffeo_aug_forward.4} parent=0 // pred_check_branch
    %10 = sbr.rel (0) target = $region9
  $region8: #{diffeo_aug_forward.4} parent=0 // pred_region
    _
  $region9: #{diffeo_aug_forward.4} parent=0 // pred_fallthru
    _
  %v11 = vld [vmem:[%s0] sm:$0x3]
  %v12 = vld [vmem:[%s0 + $0x2] sm:$0x3]
  %v13 = vld [vmem:[%s0 + $0x4] sm:$0x3]
  %v14 = vld [vmem:[%s0 + $0x6] sm:$0x3]
  %v15 = vld [vmem:[%s0 + $0x8] sm:$0x3]
  %v16 = vld [vmem:[%s0 + $0xa] sm:$0x3]
  %v17 = vld [vmem:[%s0 + $0xc] sm:$0x3]
  %v18 = vld [vmem:[%s0 + $0xe] sm:$0x3]
  %v19 = vld [vmem:[%s0 + $0x10] sm:$0x3]
  %v20 = vld [vmem:[%s0 + $0x12] sm:$0x3]
  %v21 = vld [vmem:[%s0 + $0x14] sm:$0x3]
  %v22 = vld [vmem:[%s0 + $0x16] sm:$0x3]
  %v23 = vld [vmem:[%s0 + $0x18] sm:$0x3]
  %v24 = vld [vmem:[%s0 + $0x1a] sm:$0x3]
  %v25 = vld [vmem:[%s0 + $0x1c] sm:$0x3]
  %v26 = vld [vmem:[%s0 + $0x1e] sm:$0x3]
  %v27 = vld [vmem:[%s1] sm:$0xff]
  %v28 = vld [vmem:[%s1 + $0x8] sm:$0xff]
  %v29 = vld [vmem:[%s1 + $0x10] sm:$0xff]
  %v30 = vld [vmem:[%s1 + $0x18] sm:$0xff]
  %v47 = vlaneseq
  %v48 = vshrl.u32 %v47, 7
  %v49 = vsub.s32 0, %v48
  %v50 = vrot.slane %v11, %v49
  %v51 = vlaneseq
  %v52 = vshrl.u32 %v51, 7
  %v53 = vsub.s32 1, %v52
  %v54 = vrot.slane %v11, %v53
  %v55 = vlaneseq
  %v56 = vshrl.u32 %v55, 7
  %v57 = vsub.s32 0, %v56
  %v58 = vrot.slane %v12, %v57
  %v59 = vlaneseq
  %v60 = vshrl.u32 %v59, 7
  %v61 = vsub.s32 1, %v60
  %v62 = vrot.slane %v12, %v61
  %v63 = vlaneseq
  %v64 = vshrl.u32 %v63, 7
  %v65 = vsub.s32 0, %v64
  %v66 = vrot.slane %v13, %v65
  %v67 = vlaneseq
  %v68 = vshrl.u32 %v67, 7
  %v69 = vsub.s32 1, %v68
  %v70 = vrot.slane %v13, %v69
  %v71 = vlaneseq
  %v72 = vshrl.u32 %v71, 7
  %v73 = vsub.s32 0, %v72
  %v74 = vrot.slane %v14, %v73
  %v75 = vlaneseq
  %v76 = vshrl.u32 %v75, 7
  %v77 = vsub.s32 1, %v76
  %v78 = vrot.slane %v14, %v77
  %v79 = vlaneseq
  %v80 = vshrl.u32 %v79, 7
  %v81 = vsub.s32 0, %v80
  %v82 = vrot.slane %v15, %v81
  %v83 = vlaneseq
  %v84 = vshrl.u32 %v83, 7
  %v85 = vsub.s32 1, %v84
  %v86 = vrot.slane %v15, %v85
  %v87 = vlaneseq
  %v88 = vshrl.u32 %v87, 7
  %v89 = vsub.s32 0, %v88
  %v90 = vrot.slane %v16, %v89
  %v91 = vlaneseq
  %v92 = vshrl.u32 %v91, 7
  %v93 = vsub.s32 1, %v92
  %v94 = vrot.slane %v16, %v93
  %v95 = vlaneseq
  %v96 = vshrl.u32 %v95, 7
  %v97 = vsub.s32 0, %v96
  %v98 = vrot.slane %v17, %v97
  %v99 = vlaneseq
  %v100 = vshrl.u32 %v99, 7
  %v101 = vsub.s32 1, %v100
  %v102 = vrot.slane %v17, %v101
  %v103 = vlaneseq
  %v104 = vshrl.u32 %v103, 7
  %v105 = vsub.s32 0, %v104
  %v106 = vrot.slane %v18, %v105
  %v107 = vlaneseq
  %v108 = vshrl.u32 %v107, 7
  %v109 = vsub.s32 1, %v108
  %v110 = vrot.slane %v18, %v109
  %v111 = vlaneseq
  %v112 = vshrl.u32 %v111, 7
  %v113 = vsub.s32 0, %v112
  %v114 = vrot.slane %v19, %v113
  %v115 = vlaneseq
  %v116 = vshrl.u32 %v115, 7
  %v117 = vsub.s32 1, %v116
  %v118 = vrot.slane %v19, %v117
  %v119 = vlaneseq
  %v120 = vshrl.u32 %v119, 7
  %v121 = vsub.s32 0, %v120
  %v122 = vrot.slane %v20, %v121
  %v123 = vlaneseq
  %v124 = vshrl.u32 %v123, 7
  %v125 = vsub.s32 1, %v124
  %v126 = vrot.slane %v20, %v125
  %v127 = vlaneseq
  %v128 = vshrl.u32 %v127, 7
  %v129 = vsub.s32 0, %v128
  %v130 = vrot.slane %v21, %v129
  %v131 = vlaneseq
  %v132 = vshrl.u32 %v131, 7
  %v133 = vsub.s32 1, %v132
  %v134 = vrot.slane %v21, %v133
  %v135 = vlaneseq
  %v136 = vshrl.u32 %v135, 7
  %v137 = vsub.s32 0, %v136
  %v138 = vrot.slane %v22, %v137
  %v139 = vlaneseq
  %v140 = vshrl.u32 %v139, 7
  %v141 = vsub.s32 1, %v140
  %v142 = vrot.slane %v22, %v141
  %v143 = vlaneseq
  %v144 = vshrl.u32 %v143, 7
  %v145 = vsub.s32 0, %v144
  %v146 = vrot.slane %v23, %v145
  %v147 = vlaneseq
  %v148 = vshrl.u32 %v147, 7
  %v149 = vsub.s32 1, %v148
  %v150 = vrot.slane %v23, %v149
  %v151 = vlaneseq
  %v152 = vshrl.u32 %v151, 7
  %v153 = vsub.s32 0, %v152
  %v154 = vrot.slane %v24, %v153
  %v155 = vlaneseq
  %v156 = vshrl.u32 %v155, 7
  %v157 = vsub.s32 1, %v156
  %v158 = vrot.slane %v24, %v157
  %v159 = vlaneseq
  %v160 = vshrl.u32 %v159, 7
  %v161 = vsub.s32 0, %v160
  %v162 = vrot.slane %v25, %v161
  %v163 = vlaneseq
  %v164 = vshrl.u32 %v163, 7
  %v165 = vsub.s32 1, %v164
  %v166 = vrot.slane %v25, %v165
  %v167 = vlaneseq
  %v168 = vshrl.u32 %v167, 7
  %v169 = vsub.s32 0, %v168
  %v170 = vrot.slane %v26, %v169
  %v171 = vlaneseq
  %v172 = vshrl.u32 %v171, 7
  %v173 = vsub.s32 1, %v172
  %v174 = vrot.slane %v26, %v173
  %v207 = vmul.f32 %v50, %v27
  %v208 = vmul.f32 %v54, %v28
  %v209 = vmul.f32 %v50, %v29
  %v210 = vmul.f32 %v54, %v30
  %v211 = vmul.f32 %v58, %v27
  %v212 = vmul.f32 %v62, %v28
  %v213 = vmul.f32 %v58, %v29
  %v214 = vmul.f32 %v62, %v30
  %v215 = vmul.f32 %v66, %v27
  %v216 = vmul.f32 %v70, %v28
  %v217 = vmul.f32 %v66, %v29
  %v218 = vmul.f32 %v70, %v30
  %v219 = vmul.f32 %v74, %v27
  %v220 = vmul.f32 %v78, %v28
  %v221 = vmul.f32 %v74, %v29
  %v222 = vmul.f32 %v78, %v30
  %v223 = vmul.f32 %v82, %v27
  %v224 = vmul.f32 %v86, %v28
  %v225 = vmul.f32 %v82, %v29
  %v226 = vmul.f32 %v86, %v30
  %v227 = vmul.f32 %v90, %v27
  %v228 = vmul.f32 %v94, %v28
  %v229 = vmul.f32 %v90, %v29
  %v230 = vmul.f32 %v94, %v30
  %v231 = vmul.f32 %v98, %v27
  %v232 = vmul.f32 %v102, %v28
  %v233 = vmul.f32 %v98, %v29
  %v234 = vmul.f32 %v102, %v30
  %v235 = vmul.f32 %v106, %v27
  %v236 = vmul.f32 %v110, %v28
  %v237 = vmul.f32 %v106, %v29
  %v238 = vmul.f32 %v110, %v30
  %v239 = vmul.f32 %v114, %v27
  %v240 = vmul.f32 %v118, %v28
  %v241 = vmul.f32 %v114, %v29
  %v242 = vmul.f32 %v118, %v30
  %v243 = vmul.f32 %v122, %v27
  %v244 = vmul.f32 %v126, %v28
  %v245 = vmul.f32 %v122, %v29
  %v246 = vmul.f32 %v126, %v30
  %v247 = vmul.f32 %v130, %v27
  %v248 = vmul.f32 %v134, %v28
  %v249 = vmul.f32 %v130, %v29
  %v250 = vmul.f32 %v134, %v30
  %v251 = vmul.f32 %v138, %v27
  %v252 = vmul.f32 %v142, %v28
  %v253 = vmul.f32 %v138, %v29
  %v254 = vmul.f32 %v142, %v30
  %v255 = vmul.f32 %v146, %v27
  %v256 = vmul.f32 %v150, %v28
  %v257 = vmul.f32 %v146, %v29
  %v258 = vmul.f32 %v150, %v30
  %v259 = vmul.f32 %v154, %v27
  %v260 = vmul.f32 %v158, %v28
  %v261 = vmul.f32 %v154, %v29
  %v262 = vmul.f32 %v158, %v30
  %v263 = vmul.f32 %v162, %v27
  %v264 = vmul.f32 %v166, %v28
  %v265 = vmul.f32 %v162, %v29
  %v266 = vmul.f32 %v166, %v30
  %v267 = vmul.f32 %v170, %v27
  %v268 = vmul.f32 %v174, %v28
  %v269 = vmul.f32 %v170, %v29
  %v270 = vmul.f32 %v174, %v30
  %v271 = vpack.c.bf16 %v209, %v207
  %v272 = vpack.c.bf16 %v210, %v208
  %v273 = vpack.c.bf16 %v213, %v211
  %v274 = vpack.c.bf16 %v214, %v212
  %v275 = vpack.c.bf16 %v217, %v215
  %v276 = vpack.c.bf16 %v218, %v216
  %v277 = vpack.c.bf16 %v221, %v219
  %v278 = vpack.c.bf16 %v222, %v220
  %v279 = vpack.c.bf16 %v225, %v223
  %v280 = vpack.c.bf16 %v226, %v224
  %v281 = vpack.c.bf16 %v229, %v227
  %v282 = vpack.c.bf16 %v230, %v228
  %v283 = vpack.c.bf16 %v233, %v231
  %v284 = vpack.c.bf16 %v234, %v232
  %v285 = vpack.c.bf16 %v237, %v235
  %v286 = vpack.c.bf16 %v238, %v236
  %v287 = vpack.c.bf16 %v241, %v239
  %v288 = vpack.c.bf16 %v242, %v240
  %v289 = vpack.c.bf16 %v245, %v243
  %v290 = vpack.c.bf16 %v246, %v244
  %v291 = vpack.c.bf16 %v249, %v247
  %v292 = vpack.c.bf16 %v250, %v248
  %v293 = vpack.c.bf16 %v253, %v251
  %v294 = vpack.c.bf16 %v254, %v252
  %v295 = vpack.c.bf16 %v257, %v255
  %v296 = vpack.c.bf16 %v258, %v256
  %v297 = vpack.c.bf16 %v261, %v259
  %v298 = vpack.c.bf16 %v262, %v260
  %v299 = vpack.c.bf16 %v265, %v263
  %v300 = vpack.c.bf16 %v266, %v264
  %v301 = vpack.c.bf16 %v269, %v267
  %v302 = vpack.c.bf16 %v270, %v268
  %v335 = vunpack.c.l.b16 %v271
  %v336 = vunpack.c.l.b16 %v272
  %v337 = vunpack.c.h.b16 %v271
  %v338 = vunpack.c.h.b16 %v272
  %v339 = vunpack.c.l.b16 %v273
  %v340 = vunpack.c.l.b16 %v274
  %v341 = vunpack.c.h.b16 %v273
  %v342 = vunpack.c.h.b16 %v274
  %v343 = vunpack.c.l.b16 %v275
  %v344 = vunpack.c.l.b16 %v276
  %v345 = vunpack.c.h.b16 %v275
  %v346 = vunpack.c.h.b16 %v276
  %v347 = vunpack.c.l.b16 %v277
  %v348 = vunpack.c.l.b16 %v278
  %v349 = vunpack.c.h.b16 %v277
  %v350 = vunpack.c.h.b16 %v278
  %v351 = vunpack.c.l.b16 %v279
  %v352 = vunpack.c.l.b16 %v280
  %v353 = vunpack.c.h.b16 %v279
  %v354 = vunpack.c.h.b16 %v280
  %v355 = vunpack.c.l.b16 %v281
  %v356 = vunpack.c.l.b16 %v282
  %v357 = vunpack.c.h.b16 %v281
  %v358 = vunpack.c.h.b16 %v282
  %v359 = vunpack.c.l.b16 %v283
  %v360 = vunpack.c.l.b16 %v284
  %v361 = vunpack.c.h.b16 %v283
  %v362 = vunpack.c.h.b16 %v284
  %v363 = vunpack.c.l.b16 %v285
  %v364 = vunpack.c.l.b16 %v286
  %v365 = vunpack.c.h.b16 %v285
  %v366 = vunpack.c.h.b16 %v286
  %v367 = vunpack.c.l.b16 %v287
  %v368 = vunpack.c.l.b16 %v288
  %v369 = vunpack.c.h.b16 %v287
  %v370 = vunpack.c.h.b16 %v288
  %v371 = vunpack.c.l.b16 %v289
  %v372 = vunpack.c.l.b16 %v290
  %v373 = vunpack.c.h.b16 %v289
  %v374 = vunpack.c.h.b16 %v290
  %v375 = vunpack.c.l.b16 %v291
  %v376 = vunpack.c.l.b16 %v292
  %v377 = vunpack.c.h.b16 %v291
  %v378 = vunpack.c.h.b16 %v292
  %v379 = vunpack.c.l.b16 %v293
  %v380 = vunpack.c.l.b16 %v294
  %v381 = vunpack.c.h.b16 %v293
  %v382 = vunpack.c.h.b16 %v294
  %v383 = vunpack.c.l.b16 %v295
  %v384 = vunpack.c.l.b16 %v296
  %v385 = vunpack.c.h.b16 %v295
  %v386 = vunpack.c.h.b16 %v296
  %v387 = vunpack.c.l.b16 %v297
  %v388 = vunpack.c.l.b16 %v298
  %v389 = vunpack.c.h.b16 %v297
  %v390 = vunpack.c.h.b16 %v298
  %v391 = vunpack.c.l.b16 %v299
  %v392 = vunpack.c.l.b16 %v300
  %v393 = vunpack.c.h.b16 %v299
  %v394 = vunpack.c.h.b16 %v300
  %v395 = vunpack.c.l.b16 %v301
  %v396 = vunpack.c.l.b16 %v302
  %v397 = vunpack.c.h.b16 %v301
  %v398 = vunpack.c.h.b16 %v302
  %v399 = vpack.c.b16 %v336, %v335
  %v400 = vpack.c.b16 %v338, %v337
  %v401 = vpack.c.b16 %v340, %v339
  %v402 = vpack.c.b16 %v342, %v341
  %v403 = vpack.c.b16 %v344, %v343
  %v404 = vpack.c.b16 %v346, %v345
  %v405 = vpack.c.b16 %v348, %v347
  %v406 = vpack.c.b16 %v350, %v349
  %v407 = vpack.c.b16 %v352, %v351
  %v408 = vpack.c.b16 %v354, %v353
  %v409 = vpack.c.b16 %v356, %v355
  %v410 = vpack.c.b16 %v358, %v357
  %v411 = vpack.c.b16 %v360, %v359
  %v412 = vpack.c.b16 %v362, %v361
  %v413 = vpack.c.b16 %v364, %v363
  %v414 = vpack.c.b16 %v366, %v365
  %v415 = vpack.c.b16 %v368, %v367
  %v416 = vpack.c.b16 %v370, %v369
  %v417 = vpack.c.b16 %v372, %v371
  %v418 = vpack.c.b16 %v374, %v373
  %v419 = vpack.c.b16 %v376, %v375
  %v420 = vpack.c.b16 %v378, %v377
  %v421 = vpack.c.b16 %v380, %v379
  %v422 = vpack.c.b16 %v382, %v381
  %v423 = vpack.c.b16 %v384, %v383
  %v424 = vpack.c.b16 %v386, %v385
  %v425 = vpack.c.b16 %v388, %v387
  %v426 = vpack.c.b16 %v390, %v389
  %v427 = vpack.c.b16 %v392, %v391
  %v428 = vpack.c.b16 %v394, %v393
  %v429 = vpack.c.b16 %v396, %v395
  %v430 = vpack.c.b16 %v398, %v397
  %463 = vst [vmem:[%s2] sm:$0xff] %v399
  %464 = vst [vmem:[%s2 + $0x8] sm:$0xff] %v400
  %465 = vst [vmem:[%s2 + $0x10] sm:$0xff] %v401
  %466 = vst [vmem:[%s2 + $0x18] sm:$0xff] %v402
  %467 = vst [vmem:[%s2 + $0x20] sm:$0xff] %v403
  %468 = vst [vmem:[%s2 + $0x28] sm:$0xff] %v404
  %469 = vst [vmem:[%s2 + $0x30] sm:$0xff] %v405
  %470 = vst [vmem:[%s2 + $0x38] sm:$0xff] %v406
  %471 = vst [vmem:[%s2 + $0x40] sm:$0xff] %v407
  %472 = vst [vmem:[%s2 + $0x48] sm:$0xff] %v408
  %473 = vst [vmem:[%s2 + $0x50] sm:$0xff] %v409
  %474 = vst [vmem:[%s2 + $0x58] sm:$0xff] %v410
  %475 = vst [vmem:[%s2 + $0x60] sm:$0xff] %v411
  %476 = vst [vmem:[%s2 + $0x68] sm:$0xff] %v412
  %477 = vst [vmem:[%s2 + $0x70] sm:$0xff] %v413
  %478 = vst [vmem:[%s2 + $0x78] sm:$0xff] %v414
  %479 = vst [vmem:[%s2 + $0x80] sm:$0xff] %v415
  %480 = vst [vmem:[%s2 + $0x88] sm:$0xff] %v416
  %481 = vst [vmem:[%s2 + $0x90] sm:$0xff] %v417
  %482 = vst [vmem:[%s2 + $0x98] sm:$0xff] %v418
  %483 = vst [vmem:[%s2 + $0xa0] sm:$0xff] %v419
  %484 = vst [vmem:[%s2 + $0xa8] sm:$0xff] %v420
  %485 = vst [vmem:[%s2 + $0xb0] sm:$0xff] %v421
  %486 = vst [vmem:[%s2 + $0xb8] sm:$0xff] %v422
  %487 = vst [vmem:[%s2 + $0xc0] sm:$0xff] %v423
  %488 = vst [vmem:[%s2 + $0xc8] sm:$0xff] %v424
  %489 = vst [vmem:[%s2 + $0xd0] sm:$0xff] %v425
  %490 = vst [vmem:[%s2 + $0xd8] sm:$0xff] %v426
  %491 = vst [vmem:[%s2 + $0xe0] sm:$0xff] %v427
  %492 = vst [vmem:[%s2 + $0xe8] sm:$0xff] %v428
  %493 = vst [vmem:[%s2 + $0xf0] sm:$0xff] %v429
  %494 = vst [vmem:[%s2 + $0xf8] sm:$0xff] %v430
  // Predicated region
  $region10: #{diffeo_aug_forward.4} parent=0 // pred_check
    _
  $region11: #{diffeo_aug_forward.4} parent=0 // pred_check_branch
    %496 = sbr.rel (0) target = $region13
  $region12: #{diffeo_aug_forward.4} parent=0 // pred_region
    _
  $region13: #{diffeo_aug_forward.4} parent=0 // pred_fallthru
    _
  // Predicated region
  $region14: #{diffeo_aug_forward.4} parent=0 // pred_check
    _
  $region15: #{diffeo_aug_forward.4} parent=0 // pred_check_branch
    %498 = sbr.rel (0) target = $region17
  $region16: #{diffeo_aug_forward.4} parent=0 // pred_region
    _
  $region17: #{diffeo_aug_forward.4} parent=0 // pred_fallthru
    _

</llo_original>
